<compile_context>
chip_gen: v6e
topology: v6e:2x2x1
jax: 0.10.0
libtpu: 0.0.40
codegen_flags: <defaults>
</compile_context>

<pallas_src>
import functools

import jax
import jax.numpy as jnp
from jax.experimental import pallas as pl
from jax.experimental.pallas import tpu as pltpu


def _density_activation_kernel(x_ref, o_ref):
    x = x_ref[...]
    # Compute in f32 (casts are free: kernel is memory-bound on every gen).
    xf = x if x.dtype == jnp.float32 else x.astype(jnp.float32)
    # sigmoid(-10x) == 0.5 - 0.5*tanh(5x): single EUP transcendental per elem.
    y = 0.5 - 0.5 * jnp.tanh(5.0 * xf)
    o_ref[...] = y.astype(o_ref.dtype)


_LANE = 128
# Widest-first candidate slab widths (multiples of 128): lane-dense, fully
# unmasked vst streams and fewer / fatter DMA descriptors.
_WIDTH_CANDIDATES = (4096, 2048, 1024, 512, 256, 128)
# Above this size, force >=2 (even) grid steps so the parallel 1-D grid can be
# sharded across both v7x TensorCores.
_MULTICORE_MIN_BYTES = 2 * 1024 * 1024
# Sublane packing per element size: f32 -> 8 rows/vreg, bf16 -> 16, int8 -> 32.
_SUBLANE_PACK = {4: 8, 2: 16, 1: 32}


def _cdiv(a: int, b: int) -> int:
    return -(-a // b)


def _round_up(a: int, b: int) -> int:
    return _cdiv(a, b) * b


@functools.lru_cache(maxsize=1)
def _generation_params():
    """(target_block_bytes, vmem_limit_bytes), keyed on the TPU generation.

    Default is the v7x-safe choice (64 MiB physical VMEM per TC): 8 MiB blocks,
    2 operands x 2 pipeline buffers x 8 MiB = 32 MiB under a 48 MiB limit.
    On 128 MiB-VMEM chips (v5e/v6e) use 16 MiB blocks under a 96 MiB limit.
    """
    target, limit = 8 * 1024 * 1024, 48 * 1024 * 1024
    try:
        cap = getattr(pltpu.get_tpu_info(), "vmem_capacity_bytes", None)
        if cap is not None and cap >= 128 * 1024 * 1024:
            target, limit = 16 * 1024 * 1024, 96 * 1024 * 1024
    except Exception:
        pass  # conservative default also works on CPU interpret / unknown HW
    return target, limit


def _run_2d(x2d: jax.Array, in_place: bool) -> jax.Array:
    rows, width = x2d.shape
    itemsize = x2d.dtype.itemsize
    sublane = _SUBLANE_PACK.get(itemsize, 8)
    total_bytes = rows * width * itemsize
    target_block, vmem_limit = _generation_params()

    # Grid-step count: enough to keep blocks <= target_block; at least 2 (and
    # an even number) once the array is big enough that splitting lets the
    # "parallel" grid axis span both v7x TensorCores.
    n_blocks = max(1, _cdiv(total_bytes, target_block))
    if total_bytes >= _MULTICORE_MIN_BYTES and rows >= 2 * sublane:
        n_blocks = max(n_blocks, 2)
    if n_blocks > 1 and n_blocks % 2:
        n_blocks += 1

    row_tile = min(rows, _round_up(_cdiv(rows, n_blocks), sublane))
    n_actual = _cdiv(rows, row_tile)
    # When it doesn't change the step count, snap row_tile to a divisor of rows
    # so the last block is full and every packed-sublane store stays unmasked.
    if n_actual > 1 and rows % row_tile != 0 and rows % sublane == 0:
        for t in range(row_tile, sublane - 1, -sublane):
            if rows % t == 0 and _cdiv(rows, t) == n_actual:
                row_tile = t
                break

    grid = (_cdiv(rows, row_tile),)
    return pl.pallas_call(
        _density_activation_kernel,
        out_shape=jax.ShapeDtypeStruct((rows, width), x2d.dtype),
        grid_spec=pltpu.PrefetchScalarGridSpec(
            num_scalar_prefetch=0,
            grid=grid,
            in_specs=[pl.BlockSpec((row_tile, width), lambda i: (i, 0))],
            out_specs=pl.BlockSpec((row_tile, width), lambda i: (i, 0)),
        ),
        input_output_aliases={0: 0} if in_place else {},
        compiler_params=pltpu.CompilerParams(
            dimension_semantics=("parallel",),
            vmem_limit_bytes=vmem_limit,
        ),
    )(x2d)


def density_activation(x: jax.Array, *, in_place: bool = False) -> jax.Array:
    """sigmoid(-10 * x), elementwise, via a Pallas TPU kernel.

    Set ``in_place=True`` only when the caller donates ``x`` (e.g. via
    ``jax.jit(..., donate_argnums=...)``); the output then reuses the input's
    HBM buffer.  In the ragged-size fallback the alias is disabled (it would
    point at a temporary, not the caller's buffer), so in-place is best-effort.
    """
    orig_shape = x.shape
    total = x.size
    if total == 0:
        return x

    # Prefer a slab width that divides the element count exactly so the
    # wrapper is a pure (free) reshape: zero extra HBM passes around the kernel.
    for cand in _WIDTH_CANDIDATES:
        if total % cand == 0:
            y2d = _run_2d(x.reshape(total // cand, cand), in_place)
            return y2d.reshape(orig_shape)

    # Ragged sizes (total % 128 != 0): run the kernel on the largest
    # lane-aligned prefix and compute the (<128-element) tail in plain jnp.
    flat = x.reshape(-1)
    main = (total // _LANE) * _LANE
    if main == 0:
        # Tiny input: a kernel launch is not worth it.
        yf = 0.5 - 0.5 * jnp.tanh(5.0 * flat.astype(jnp.float32))
        return yf.astype(x.dtype).reshape(orig_shape)
    head = None
    for cand in _WIDTH_CANDIDATES:
        if main % cand == 0:
            head = _run_2d(flat[:main].reshape(main // cand, cand), in_place=False)
            break
    tail_f = 0.5 - 0.5 * jnp.tanh(5.0 * flat[main:].astype(jnp.float32))
    tail = tail_f.astype(x.dtype)
    return jnp.concatenate([head.reshape(-1), tail]).reshape(orig_shape)


if __name__ == "__main__":
    key = jax.random.PRNGKey(0)
    # Small NCHW-style input consistent with the module's usage.
    x = jax.random.normal(key, (2, 4, 16, 16), dtype=jnp.float32)
    y = density_activation(x)
    jax.block_until_ready(y)
    y_ref = jax.nn.sigmoid(-10.0 * x)
    assert y.shape == x.shape and y.dtype == x.dtype
    assert jnp.allclose(y, y_ref, atol=1e-5, rtol=1e-5)

    # Exercise the multi-block (>= 2 MiB -> grid >= 2) path.
    k2, k3 = jax.random.split(jax.random.PRNGKey(1))
    x2 = jax.random.normal(k2, (768, 1024), dtype=jnp.float32)  # 3 MiB
    y2 = density_activation(x2)
    jax.block_until_ready(y2)
    assert jnp.allclose(y2, jax.nn.sigmoid(-10.0 * x2), atol=1e-5, rtol=1e-5)

    # Exercise the ragged-size fallback (231 elements, not divisible by 128).
    x3 = jax.random.normal(k3, (7, 33), dtype=jnp.float32)
    y3 = density_activation(x3)
    jax.block_until_ready(y3)
    assert y3.shape == x3.shape
    assert jnp.allclose(y3, jax.nn.sigmoid(-10.0 * x3), atol=1e-5, rtol=1e-5)

    print("KERNEL_OK")
</pallas_src>

<mosaic_0001>
module attributes {stable_mosaic.version = 11 : i64} {
  func.func @_density_activation_kernel(%arg0: i32, %arg1: memref<1x2048xf32, #tpu.memory_space<vmem>>, %arg2: memref<1x2048xf32, #tpu.memory_space<vmem>>) attributes {dimension_semantics = [#tpu.dimension_semantics<parallel>], iteration_bounds = array<i64: 1>, scalar_prefetch = 0 : i64, scratch_operands = 0 : i64, tpu.core_type = #tpu.core_type<tc>, window_params = [{transform_indices = @transform_0, window_bounds = array<i64: 1, 2048>}, {transform_indices = @transform_1, window_bounds = array<i64: 1, 2048>}]} {
    %c0 = arith.constant 0 : index
    %c0_0 = arith.constant 0 : index
    %0 = vector.load %arg1[%c0, %c0_0] : memref<1x2048xf32, #tpu.memory_space<vmem>>, vector<1x2048xf32>
    %cst = arith.constant 5.000000e+00 : f32
    %1 = vector.broadcast %cst : f32 to vector<1x2048xf32>
    %2 = arith.mulf %1, %0 : vector<1x2048xf32>
    %3 = math.tanh %2 : vector<1x2048xf32>
    %cst_1 = arith.constant 5.000000e-01 : f32
    %4 = vector.broadcast %cst_1 : f32 to vector<1x2048xf32>
    %5 = arith.mulf %4, %3 : vector<1x2048xf32>
    %cst_2 = arith.constant 5.000000e-01 : f32
    %6 = vector.broadcast %cst_2 : f32 to vector<1x2048xf32>
    %7 = arith.subf %6, %5 : vector<1x2048xf32>
    %c0_3 = arith.constant 0 : index
    %c0_4 = arith.constant 0 : index
    %8 = vector.load %arg2[%c0_3, %c0_4] : memref<1x2048xf32, #tpu.memory_space<vmem>>, vector<1x2048xf32>
    tpu.vector_store %arg2[%c0_3, %c0_4], %7 {strides = array<i32>} : memref<1x2048xf32, #tpu.memory_space<vmem>>, vector<1x2048xf32>,
    return
  }
  func.func @transform_0(%arg0: i32) -> (i32, i32) {
    %c0_i32 = arith.constant 0 : i32
    %c0_i32_0 = arith.constant 0 : i32
    return %arg0, %c0_i32 : i32, i32
  }
  func.func @transform_1(%arg0: i32) -> (i32, i32) {
    %c0_i32 = arith.constant 0 : i32
    %c0_i32_0 = arith.constant 0 : i32
    return %arg0, %c0_i32 : i32, i32
  }
}

</mosaic_0001>

<llo_original>
// kernel: tpu_custom_call.1
$region0: #{tpu_custom_call.1}
  #allocation0 [shape = 'u32[]', space=smem, size = 0x4, offset = 0x4, fixed_abs, tag = 'smem constant byte address 0x4 - core index']
  #allocation1 [shape = 'u32[144,128]{1,0:T(1,128)}', space=vmem, size = 0x12000, scoped, tag = 'internal scratch']
  %s0 = inlined_call_operand.hbm [shape: f32[1,2048], index: 0, kind: input, shape index: {}]
  %s1 = inlined_call_operand.hbm [shape: f32[1,2048], index: 1, kind: output, shape index: {}]
  %s2 = sld [smem:[#allocation0]]
  $region18: #{tpu_custom_call.1} parent=0
    _
  %s4 = ssub.s32 1, %s2
  %s5 = scalar_select 0, %s4, %s2
  $region1: #{tpu_custom_call.1} parent=0
    #allocation2 [shape = 'u8[8192]{0}', space=vmem, size = 0x2000, scoped, tag = 'input window, operand 0, single buffered']
    #allocation3 [shape = 's32[1]{0}', space=sflag, size = 0x4, scoped, tag = 'scoped memory for tpu_custom_call.1']
    #allocation4 [shape = 's32[1]{0}', space=sflag, size = 0x4, scoped, tag = 'scoped memory for tpu_custom_call.1']
    #allocation5 [shape = 'u8[8192]{0}', space=vmem, size = 0x2000, scoped, tag = 'output window, operand 0, single buffered']
    %6 = vsyncpa [#allocation3], 0
    %7 = vsyncpa [#allocation4], 0
    // Predicated region
    $region2: #{tpu_custom_call.1} parent=1 // pred_check
      _
    $region3: #{tpu_custom_call.1} parent=1 // pred_check_branch
      %9 = sbr.rel (0) target = $region5
    $region4: #{tpu_custom_call.1} parent=1 // pred_region
      %s11 = ssub.s32 256, 256
      %12 = vsyncadd [#allocation3], %s11
      %s14 = sshll.u32 [#allocation2], 4
      %s15 = int_to_ptr.vmem [resolvable:$true] %s14
      %17 = dma.hbm_to_vmem [thread:$0]  %s0, 256, %s15, [#allocation3]
    $region5: #{tpu_custom_call.1} parent=1 // pred_fallthru
      _
    // Predicated region
    $region6: #{tpu_custom_call.1} parent=1 // pred_check
      _
    $region7: #{tpu_custom_call.1} parent=1 // pred_check_branch
      %19 = sbr.rel (0) target = $region9
    $region8: #{tpu_custom_call.1} parent=1 // pred_region
      %20 = dma.done [#allocation3], 256
    $region9: #{tpu_custom_call.1} parent=1 // pred_fallthru
      _
    %v21 = vld [vmem:[#allocation2] sm:$0xff]
    %v22 = vld [vmem:[#allocation2 + $0x8] sm:$0xff]
    %v23 = vmul.f32 %v21, 5.0
    %v24 = vmul.f32 %v22, 5.0
    %v25 = vtanh.pop %v23
    %v26 = vtanh.pop %v24
    %v27 = vmul.f32 %v25, 0.5
    %v28 = vmul.f32 %v26, 0.5
    %v29 = vsub.f32 0.5, %v27
    %v30 = vsub.f32 0.5, %v28
    %31 = vst [vmem:[#allocation5] sm:$0xff] %v29
    %32 = vst [vmem:[#allocation5 + $0x8] sm:$0xff] %v30
    // Predicated region
    $region10: #{tpu_custom_call.1} parent=1 // pred_check
      _
    $region11: #{tpu_custom_call.1} parent=1 // pred_check_branch
      %34 = sbr.rel (0) target = $region13
    $region12: #{tpu_custom_call.1} parent=1 // pred_region
      %s36 = ssub.s32 256, 256
      %37 = vsyncadd [#allocation4], %s36
      %s39 = sshll.u32 [#allocation5], 4
      %s40 = int_to_ptr.vmem [resolvable:$true] %s39
      %42 = dma.vmem_to_hbm [thread:$0]  %s40, 256, %s1, [#allocation4]
    $region13: #{tpu_custom_call.1} parent=1 // pred_fallthru
      _
    // Predicated region
    $region14: #{tpu_custom_call.1} parent=1 // pred_check
      _
    $region15: #{tpu_custom_call.1} parent=1 // pred_check_branch
      %44 = sbr.rel (0) target = $region17
    $region16: #{tpu_custom_call.1} parent=1 // pred_region
      %45 = dma.done [#allocation4], 256
    $region17: #{tpu_custom_call.1} parent=1 // pred_fallthru
      _
    %46 = vsyncpa [#allocation3], 1
    %47 = vsyncpa [#allocation4], 1

</llo_original>
